<compile_context>
chip_gen: v7x
topology: tpu7x:2x2x1
jax: 0.10.0
libtpu: 0.0.40
codegen_flags: <defaults>
</compile_context>

<pallas_src>
import jax
import jax.numpy as jnp
from jax import lax
from jax.experimental import pallas as pl
from jax.experimental.pallas import tpu as pltpu


def _grad_potential_kernel(x_ref, lab_ref, emb_ref, w1_ref, w1g_ref, grad_ref):
    # x_ref:    (TB, D)      bf16 tile of inputs
    # lab_ref:  (TB, 1)      int32 labels for this tile
    # emb_ref:  (C_pad, H)   bf16 embedding table with b1 folded in (resident)
    # w1_ref:   (D, H)       bf16 first-layer weight (resident)
    # w1g_ref:  (H, D)       bf16 (W1 * w2)^T second-matmul weight (resident)
    # grad_ref: (TB, D)      f32 output dU/dX tile
    tb = x_ref.shape[0]
    c_pad = emb_ref.shape[0]

    # In-kernel embedding "gather" as a one-hot matmul on the MXU.
    # One-hot values (0/1) are exactly representable in bf16.
    labels = lab_ref[...]                                        # (TB, 1) i32
    class_ids = lax.broadcasted_iota(jnp.int32, (tb, c_pad), 1)  # (TB, C_pad)
    onehot = (labels == class_ids).astype(jnp.bfloat16)          # (TB, C_pad)
    elab_b1 = jnp.dot(onehot, emb_ref[...],
                      preferred_element_type=jnp.float32)        # (TB, H) f32

    # First matmul: bf16 operands, f32 accumulation.  Activation math stays
    # in f32 (EUP/VPU slots have slack; v5e has no bf16 path there).
    pre = jnp.dot(x_ref[...], w1_ref[...],
                  preferred_element_type=jnp.float32) + elab_b1  # (TB, H) f32
    h = jnp.tanh(pre)                                            # f32
    g = (1.0 - h * h).astype(jnp.bfloat16)                       # (TB, H) bf16

    # Second matmul: w2 is already folded into w1g, canonical NN layout.
    grad_ref[...] = jnp.dot(g, w1g_ref[...],
                            preferred_element_type=jnp.float32)  # (TB, D) f32


def grad_cond_potential(X, labels, params, *, tile_b=512):
    """Pallas implementation of Grad_cond_potential.forward(X, labels)."""
    W1, b1, w2, b2, emb = params  # b2 does not affect the gradient
    B, D = X.shape
    H = W1.shape[1]
    C = emb.shape[0]

    # Batch tile: as large as possible (amortize per-grid-step overhead and
    # reuse MXU weight pushes) but keep >= 2 grid steps so both of v7x's
    # TensorCores get work; multiple of 16 for bf16 sublane packing.
    tile_b = min(tile_b, B)
    if tile_b == B and B >= 32 and (B // 2) % 16 == 0:
        tile_b = B // 2
    assert B % tile_b == 0, "batch must be divisible by tile_b"
    assert tile_b % 16 == 0 or tile_b == B

    # Fold b1 into the embedding rows and w2 into the pre-transposed second
    # matmul weight; cast all MXU operands to bf16 (f32 accumulation happens
    # in-kernel via preferred_element_type).
    emb_b1 = (emb.astype(jnp.float32)
              + b1.astype(jnp.float32)[None, :]).astype(jnp.bfloat16)
    c_pad = ((C + 15) // 16) * 16
    if c_pad != C:
        emb_b1 = jnp.pad(emb_b1, ((0, c_pad - C), (0, 0)))

    w1_bf16 = W1.astype(jnp.bfloat16)                                   # (D, H)
    w1g = (W1.astype(jnp.float32)
           * w2.astype(jnp.float32)[None, :]).T.astype(jnp.bfloat16)    # (H, D)
    x_bf16 = X.astype(jnp.bfloat16)
    labels_2d = labels.astype(jnp.int32).reshape(B, 1)

    # TODO(synk): for very large class counts the resident (C, H) table can
    # exceed v7x's smaller scoped-VMEM budget; in that regime switch to a
    # scalar-prefetch label DMA gather (or raise vmem_limit_bytes).

    grid = (B // tile_b,)
    return pl.pallas_call(
        _grad_potential_kernel,
        out_shape=jax.ShapeDtypeStruct((B, D), jnp.float32),
        grid_spec=pltpu.PrefetchScalarGridSpec(
            num_scalar_prefetch=0,
            grid=grid,
            in_specs=[
                pl.BlockSpec((tile_b, D), lambda i: (i, 0)),   # X tile (bf16)
                pl.BlockSpec((tile_b, 1), lambda i: (i, 0)),   # labels tile
                pl.BlockSpec((c_pad, H), lambda i: (0, 0)),    # emb (+b1), resident
                pl.BlockSpec((D, H), lambda i: (0, 0)),        # W1, resident
                pl.BlockSpec((H, D), lambda i: (0, 0)),        # (W1*w2)^T, resident
            ],
            out_specs=pl.BlockSpec((tile_b, D), lambda i: (i, 0)),
        ),
        compiler_params=pltpu.CompilerParams(
            dimension_semantics=("parallel",)
        ),
    )(x_bf16, labels_2d, emb_b1, w1_bf16, w1g)


def _potential_ref(X, labels, params):
    """Pure-JAX f32 reference of the potential (for grad checking)."""
    W1, b1, w2, b2, emb = params
    h = jnp.tanh(X @ W1 + emb[labels] + b1)
    return (h @ w2 + b2).sum()


if __name__ == "__main__":
    # Small shapes: batch large enough for two 128-row tiles (>= 2 grid steps
    # so both v7x TensorCores are exercised), D = 128 lane-dense output.
    B, D, H, C = 256, 128, 256, 4

    key = jax.random.PRNGKey(0)
    k_x, k_w1, k_b1, k_w2, k_emb, k_lab = jax.random.split(key, 6)

    X = jax.random.normal(k_x, (B, D), dtype=jnp.float32)
    labels = jax.random.randint(k_lab, (B,), 0, C, dtype=jnp.int32)

    # Deterministic synthetic parameters for the potential network.
    W1 = jax.random.normal(k_w1, (D, H), dtype=jnp.float32) * 0.05
    b1 = jax.random.normal(k_b1, (H,), dtype=jnp.float32) * 0.05
    w2 = jax.random.normal(k_w2, (H,), dtype=jnp.float32) * 0.05
    b2 = jnp.float32(0.1)
    emb = jax.random.normal(k_emb, (C, H), dtype=jnp.float32) * 0.05
    params = (W1, b1, w2, b2, emb)

    grad_pallas = grad_cond_potential(X, labels, params)
    grad_pallas = jax.block_until_ready(grad_pallas)

    # Sanity check against f32 autodiff of the same potential (what the
    # PyTorch module does via out.backward()).  Tolerance loosened because
    # the kernel uses bf16 MXU operands (f32 accumulation / f32 tanh).
    grad_ref = jax.grad(_potential_ref)(X, labels, params)
    assert grad_pallas.shape == (B, D)
    assert jnp.allclose(grad_pallas, grad_ref, atol=2e-3, rtol=3e-2)

    print("KERNEL_OK")
</pallas_src>

<mosaic_0001>
module attributes {stable_mosaic.version = 11 : i64} {
  func.func @_grad_potential_kernel(%arg0: i32, %arg1: memref<128x128xbf16, #tpu.memory_space<vmem>>, %arg2: memref<128x1xi32, #tpu.memory_space<vmem>>, %arg3: memref<16x256xbf16, #tpu.memory_space<vmem>>, %arg4: memref<128x256xbf16, #tpu.memory_space<vmem>>, %arg5: memref<256x128xbf16, #tpu.memory_space<vmem>>, %arg6: memref<128x128xf32, #tpu.memory_space<vmem>>) attributes {dimension_semantics = [#tpu.dimension_semantics<parallel>], iteration_bounds = array<i64: 2>, scalar_prefetch = 0 : i64, scratch_operands = 0 : i64, tpu.core_type = #tpu.core_type<tc>, window_params = [{transform_indices = @transform_0, window_bounds = array<i64: 128, 128>}, {transform_indices = @transform_1, window_bounds = array<i64: 128, 1>}, {pipeline_mode = #tpu.pipeline_mode<synchronous>, transform_indices = @transform_2, window_bounds = array<i64: 16, 256>}, {pipeline_mode = #tpu.pipeline_mode<synchronous>, transform_indices = @transform_3, window_bounds = array<i64: 128, 256>}, {pipeline_mode = #tpu.pipeline_mode<synchronous>, transform_indices = @transform_4, window_bounds = array<i64: 256, 128>}, {transform_indices = @transform_5, window_bounds = array<i64: 128, 128>}]} {
    %c0 = arith.constant 0 : index
    %c0_0 = arith.constant 0 : index
    %0 = vector.load %arg2[%c0, %c0_0] : memref<128x1xi32, #tpu.memory_space<vmem>>, vector<128x1xi32>
    %1 = tpu.iota {dimensions = array<i32: 1>} : vector<128x16xi32>
    %2 = vector.broadcast %0 : vector<128x1xi32> to vector<128x16xi32>
    %3 = arith.cmpi eq, %2, %1 : vector<128x16xi32>
    %4 = arith.extui %3 : vector<128x16xi1> to vector<128x16xi32>
    %5 = arith.sitofp %4 : vector<128x16xi32> to vector<128x16xf32>
    %6 = arith.truncf %5 : vector<128x16xf32> to vector<128x16xbf16>
    %c0_1 = arith.constant 0 : index
    %c0_2 = arith.constant 0 : index
    %7 = vector.load %arg3[%c0_1, %c0_2] : memref<16x256xbf16, #tpu.memory_space<vmem>>, vector<16x256xbf16>
    %cst = arith.constant dense<0.000000e+00> : vector<128x256xf32>
    %8 = tpu.matmul %6, %7, %cst {dimension_numbers = #tpu.dot_dimension_numbers<[1], [0], [0], [1], [0, 0, 1, 1], [], []>} : vector<128x16xbf16>, vector<16x256xbf16>, vector<128x256xf32> -> vector<128x256xf32>
    %c0_3 = arith.constant 0 : index
    %c0_4 = arith.constant 0 : index
    %9 = vector.load %arg1[%c0_3, %c0_4] : memref<128x128xbf16, #tpu.memory_space<vmem>>, vector<128x128xbf16>
    %c0_5 = arith.constant 0 : index
    %c0_6 = arith.constant 0 : index
    %10 = vector.load %arg4[%c0_5, %c0_6] : memref<128x256xbf16, #tpu.memory_space<vmem>>, vector<128x256xbf16>
    %cst_7 = arith.constant dense<0.000000e+00> : vector<128x256xf32>
    %11 = tpu.matmul %9, %10, %cst_7 {dimension_numbers = #tpu.dot_dimension_numbers<[1], [0], [0], [1], [0, 0, 1, 1], [], []>} : vector<128x128xbf16>, vector<128x256xbf16>, vector<128x256xf32> -> vector<128x256xf32>
    %12 = arith.addf %11, %8 : vector<128x256xf32>
    %13 = math.tanh %12 : vector<128x256xf32>
    %14 = arith.mulf %13, %13 : vector<128x256xf32>
    %cst_8 = arith.constant 1.000000e+00 : f32
    %15 = vector.broadcast %cst_8 : f32 to vector<128x256xf32>
    %16 = arith.subf %15, %14 : vector<128x256xf32>
    %17 = arith.truncf %16 : vector<128x256xf32> to vector<128x256xbf16>
    %c0_9 = arith.constant 0 : index
    %c0_10 = arith.constant 0 : index
    %18 = vector.load %arg5[%c0_9, %c0_10] : memref<256x128xbf16, #tpu.memory_space<vmem>>, vector<256x128xbf16>
    %cst_11 = arith.constant dense<0.000000e+00> : vector<128x128xf32>
    %19 = tpu.matmul %17, %18, %cst_11 {dimension_numbers = #tpu.dot_dimension_numbers<[1], [0], [0], [1], [0, 0, 1, 1], [], []>} : vector<128x256xbf16>, vector<256x128xbf16>, vector<128x128xf32> -> vector<128x128xf32>
    %c0_12 = arith.constant 0 : index
    %c0_13 = arith.constant 0 : index
    %20 = vector.load %arg6[%c0_12, %c0_13] : memref<128x128xf32, #tpu.memory_space<vmem>>, vector<128x128xf32>
    tpu.vector_store %arg6[%c0_12, %c0_13], %19 {strides = array<i32>} : memref<128x128xf32, #tpu.memory_space<vmem>>, vector<128x128xf32>,
    return
  }
  func.func @transform_0(%arg0: i32) -> (i32, i32) {
    %c0_i32 = arith.constant 0 : i32
    %c0_i32_0 = arith.constant 0 : i32
    return %arg0, %c0_i32 : i32, i32
  }
  func.func @transform_1(%arg0: i32) -> (i32, i32) {
    %c0_i32 = arith.constant 0 : i32
    %c0_i32_0 = arith.constant 0 : i32
    return %arg0, %c0_i32 : i32, i32
  }
  func.func @transform_2(%arg0: i32) -> (i32, i32) {
    %c0_i32 = arith.constant 0 : i32
    %c0_i32_0 = arith.constant 0 : i32
    %c0_i32_1 = arith.constant 0 : i32
    return %c0_i32, %c0_i32_0 : i32, i32
  }
  func.func @transform_3(%arg0: i32) -> (i32, i32) {
    %c0_i32 = arith.constant 0 : i32
    %c0_i32_0 = arith.constant 0 : i32
    %c0_i32_1 = arith.constant 0 : i32
    return %c0_i32, %c0_i32_0 : i32, i32
  }
  func.func @transform_4(%arg0: i32) -> (i32, i32) {
    %c0_i32 = arith.constant 0 : i32
    %c0_i32_0 = arith.constant 0 : i32
    %c0_i32_1 = arith.constant 0 : i32
    return %c0_i32, %c0_i32_0 : i32, i32
  }
  func.func @transform_5(%arg0: i32) -> (i32, i32) {
    %c0_i32 = arith.constant 0 : i32
    %c0_i32_0 = arith.constant 0 : i32
    return %arg0, %c0_i32 : i32, i32
  }
}

</mosaic_0001>

<llo_original>
// kernel: tpu_custom_call.1
$region0: #{tpu_custom_call.1}
  #allocation0 [shape = 'u32[]', space=smem, size = 0x4, offset = 0x4, fixed_abs, tag = 'smem constant byte address 0x4 - core index']
  #allocation1 [shape = 'u32[144,128]{1,0:T(1,128)}', space=vmem, size = 0x12000, scoped, tag = 'internal scratch']
  %s0 = inlined_call_operand.vmem [shape: bf16[256,128], index: 0, kind: input, shape index: {}]
  %s1 = inlined_call_operand.vmem [shape: s32[256,1], index: 1, kind: input, shape index: {}]
  %s2 = inlined_call_operand.hbm [shape: bf16[16,256], index: 2, kind: input, shape index: {}]
  %s3 = inlined_call_operand.vmem [shape: bf16[128,256], index: 3, kind: input, shape index: {}]
  %s4 = inlined_call_operand.hbm [shape: bf16[256,128], index: 4, kind: input, shape index: {}]
  %s5 = inlined_call_operand.hbm [shape: f32[256,128], index: 5, kind: output, shape index: {}]
  %s6 = sld [smem:[#allocation0]]
  $region61: #{tpu_custom_call.1} parent=0
    _
  %s8 = ssub.s32 1, %s6
  %s9 = scalar_select 0, %s8, %s6
  $region1: #{tpu_custom_call.1} parent=0
    #allocation2 [shape = 'u8[8192]{0}', space=vmem, size = 0x2000, scoped, tag = 'input window, operand 2, single buffered']
    #allocation3 [shape = 's32[2]{0}', space=sflag, size = 0x8, scoped, tag = 'scoped memory for tpu_custom_call.1']
    #allocation4 [shape = 's32[2]{0}', space=sflag, size = 0x8, scoped, tag = 'scoped memory for tpu_custom_call.1']
    #allocation5 [shape = 'u8[65536]{0}', space=vmem, size = 0x10000, scoped, tag = 'input window, operand 4, single buffered']
    #allocation6 [shape = 's32[1]{0}', space=sflag, size = 0x4, scoped, tag = 'scoped memory for tpu_custom_call.1']
    #allocation7 [shape = 'u8[131072]{0}', space=vmem, size = 0x20000, scoped, tag = 'output window, operand 0']
    %10 = vsyncpa [#allocation3], 0
    %11 = vsyncpa [#allocation6], 0
    %12 = vsyncpa [#allocation4], 0
    %s13 = scalar_lea.sflag [#allocation4], 1
    %14 = vsyncpa %s13, 0
    loop: start=0, step=1, limit=4
    $region2: #{tpu_custom_call.1} parent=1 // loop_pre_header
      _
    $region3: #{tpu_custom_call.1} parent=1 // loop_header
      %s16 = sphi 0, %s20
      %p17 = scmp.ge.s32.totalorder %s16, 4
      %s26 = sphi 0, %s28
      %s29 = sphi 0, %s26
      %s30 = sphi 0, %s29
      %s46 = sphi 0, %s30
      %s52 = sphi 0, %s54
      %s55 = sphi 0, %s52
      %s56 = sphi 0, %s55
      %s72 = sphi 0, %s56
      %s76 = sphi 0, %s76
      %s78 = sphi 0, %s76
      %s79 = sphi 0, %s78
      %s93 = sphi 0, %s79
      %s97 = sphi 0, %s97
      %s99 = sphi 0, %s97
      %s100 = sphi 0, %s99
      %s114 = sphi 0, %s100
      %s118 = sphi 0, %s118
      %s120 = sphi 0, %s118
      %s121 = sphi 0, %s120
      %s135 = sphi 0, %s121
      %s141 = sphi 0, %s143
      %s144 = sphi 0, %s141
      %s145 = sphi 0, %s144
      %s161 = sphi 0, %s145
    $region4: #{tpu_custom_call.1} parent=1 // loop_header_branch
      %19 = sbr.rel (%p17) target = $region8
    $region5: #{tpu_custom_call.1} parent=1 // loop_body
      %s21 = ssub.s32 %s16, 1
      %s22 = ssub.s32 %s16, 2
      %s23 = sadd.s32 %s16, 1
      %s24 = ssub.s32 %s16, %s23
      %p25 = scmp.eq.s32.totalorder %s24, 0
      %s27 = sadd.s32 %s26, 1
      %s28 = scalar_select %p25, %s26, %s27
      %p31 = pneg %p25
      %p32 = scmp.eq.s32.totalorder %s16, 1
      %p33 = por %p31, %p32
      %p34 = scmp.ne.s32.totalorder %s26, %s29
      %p35 = scmp.eq.s32.totalorder %s16, 0
      %p36 = por %p34, %p35
      %p37 = scmp.ne.s32.totalorder %s26, %s29
      %p38 = scmp.eq.s32.totalorder %s21, 1
      %p39 = por %p37, %p38
      %p40 = scmp.ne.s32.totalorder %s29, %s30
      %p41 = scmp.eq.s32.totalorder %s21, 0
      %p42 = por %p40, %p41
      %p43 = scmp.ne.s32.totalorder %s29, %s30
      %p44 = scmp.eq.s32.totalorder %s22, 1
      %p45 = por %p43, %p44
      %p47 = scmp.ne.s32.totalorder %s30, %s46
      %p48 = scmp.eq.s32.totalorder %s22, 0
      %p49 = por %p47, %p48
      %s50 = ssub.s32 %s16, %s23
      %p51 = scmp.eq.s32.totalorder %s50, 0
      %s53 = sadd.s32 %s52, 1
      %s54 = scalar_select %p51, %s52, %s53
      %p57 = pneg %p51
      %p58 = scmp.eq.s32.totalorder %s16, 1
      %p59 = por %p57, %p58
      %p60 = scmp.ne.s32.totalorder %s52, %s55
      %p61 = scmp.eq.s32.totalorder %s16, 0
      %p62 = por %p60, %p61
      %p63 = scmp.ne.s32.totalorder %s52, %s55
      %p64 = scmp.eq.s32.totalorder %s21, 1
      %p65 = por %p63, %p64
      %p66 = scmp.ne.s32.totalorder %s55, %s56
      %p67 = scmp.eq.s32.totalorder %s21, 0
      %p68 = por %p66, %p67
      %p69 = scmp.ne.s32.totalorder %s55, %s56
      %p70 = scmp.eq.s32.totalorder %s22, 1
      %p71 = por %p69, %p70
      %p73 = scmp.ne.s32.totalorder %s56, %s72
      %p74 = scmp.eq.s32.totalorder %s22, 0
      %p75 = por %p73, %p74
      %s77 = sadd.s32 %s76, 1
      %p80 = scmp.eq.s32.totalorder %s16, 1
      %p81 = scmp.ne.s32.totalorder %s76, %s78
      %p82 = scmp.eq.s32.totalorder %s16, 0
      %p83 = por %p81, %p82
      %p84 = scmp.ne.s32.totalorder %s76, %s78
      %p85 = scmp.eq.s32.totalorder %s21, 1
      %p86 = por %p84, %p85
      %p87 = scmp.ne.s32.totalorder %s78, %s79
      %p88 = scmp.eq.s32.totalorder %s21, 0
      %p89 = por %p87, %p88
      %p90 = scmp.ne.s32.totalorder %s78, %s79
      %p91 = scmp.eq.s32.totalorder %s22, 1
      %p92 = por %p90, %p91
      %p94 = scmp.ne.s32.totalorder %s79, %s93
      %p95 = scmp.eq.s32.totalorder %s22, 0
      %p96 = por %p94, %p95
      %s98 = sadd.s32 %s97, 1
      %p101 = scmp.eq.s32.totalorder %s16, 1
      %p102 = scmp.ne.s32.totalorder %s97, %s99
      %p103 = scmp.eq.s32.totalorder %s16, 0
      %p104 = por %p102, %p103
      %p105 = scmp.ne.s32.totalorder %s97, %s99
      %p106 = scmp.eq.s32.totalorder %s21, 1
      %p107 = por %p105, %p106
      %p108 = scmp.ne.s32.totalorder %s99, %s100
      %p109 = scmp.eq.s32.totalorder %s21, 0
      %p110 = por %p108, %p109
      %p111 = scmp.ne.s32.totalorder %s99, %s100
      %p112 = scmp.eq.s32.totalorder %s22, 1
      %p113 = por %p111, %p112
      %p115 = scmp.ne.s32.totalorder %s100, %s114
      %p116 = scmp.eq.s32.totalorder %s22, 0
      %p117 = por %p115, %p116
      %s119 = sadd.s32 %s118, 1
      %p122 = scmp.eq.s32.totalorder %s16, 1
      %p123 = scmp.ne.s32.totalorder %s118, %s120
      %p124 = scmp.eq.s32.totalorder %s16, 0
      %p125 = por %p123, %p124
      %p126 = scmp.ne.s32.totalorder %s118, %s120
      %p127 = scmp.eq.s32.totalorder %s21, 1
      %p128 = por %p126, %p127
      %p129 = scmp.ne.s32.totalorder %s120, %s121
      %p130 = scmp.eq.s32.totalorder %s21, 0
      %p131 = por %p129, %p130
      %p132 = scmp.ne.s32.totalorder %s120, %s121
      %p133 = scmp.eq.s32.totalorder %s22, 1
      %p134 = por %p132, %p133
      %p136 = scmp.ne.s32.totalorder %s121, %s135
      %p137 = scmp.eq.s32.totalorder %s22, 0
      %p138 = por %p136, %p137
      %s139 = ssub.s32 %s16, %s23
      %p140 = scmp.eq.s32.totalorder %s139, 0
      %s142 = sadd.s32 %s141, 1
      %s143 = scalar_select %p140, %s141, %s142
      %p146 = pneg %p140
      %p147 = scmp.eq.s32.totalorder %s16, 1
      %p148 = por %p146, %p147
      %p149 = scmp.ne.s32.totalorder %s141, %s144
      %p150 = scmp.eq.s32.totalorder %s16, 0
      %p151 = por %p149, %p150
      %p152 = scmp.ne.s32.totalorder %s141, %s144
      %p153 = scmp.eq.s32.totalorder %s21, 1
      %p154 = por %p152, %p153
      %p155 = scmp.ne.s32.totalorder %s144, %s145
      %p156 = scmp.eq.s32.totalorder %s21, 0
      %p157 = por %p155, %p156
      %p158 = scmp.ne.s32.totalorder %s144, %s145
      %p159 = scmp.eq.s32.totalorder %s22, 1
      %p160 = por %p158, %p159
      %p162 = scmp.ne.s32.totalorder %s145, %s161
      %p163 = scmp.eq.s32.totalorder %s22, 0
      %p164 = por %p162, %p163
      %p165 = scmp.le.s32.totalorder 1, %s16
      %p166 = scmp.lt.s32.totalorder %s16, 3
      %p167 = pnand %p165, %p166
      %p168 = pneg %p167
      // Predicated region
      $region9: #{tpu_custom_call.1} parent=5 // pred_check
        _
      $region10: #{tpu_custom_call.1} parent=5 // pred_check_branch
        %170 = sbr.rel (%p167) target = $region12
      $region11: #{tpu_custom_call.1} parent=5 // pred_region
        %s171 = ssub.s32 %s16, 1
        // Predicated region
        $region13: #{tpu_custom_call.1} parent=11 // pred_check
          %p172 = pneg %p89
        $region14: #{tpu_custom_call.1} parent=11 // pred_check_branch
          %174 = sbr.rel (%p172) target = $region16
        $region15: #{tpu_custom_call.1} parent=11 // pred_region
          %s176 = ssub.s32 256, 256
          %177 = vsyncadd [#allocation3], %s176
          %s178 = sshll.u32 [#allocation2], 4
          %s179 = int_to_ptr.vmem [resolvable:$true] %s178
          %184 = dma.hbm_to_vmem [thread:$0]  %s2, 256, %s179, [#allocation3], 128, 128, 8
        $region16: #{tpu_custom_call.1} parent=11 // pred_fallthru
          _
        // Predicated region
        $region17: #{tpu_custom_call.1} parent=11 // pred_check
          %p185 = pneg %p110
        $region18: #{tpu_custom_call.1} parent=11 // pred_check_branch
          %187 = sbr.rel (%p185) target = $region20
        $region19: #{tpu_custom_call.1} parent=11 // pred_region
          _
        $region20: #{tpu_custom_call.1} parent=11 // pred_fallthru
          _
        // Predicated region
        $region21: #{tpu_custom_call.1} parent=11 // pred_check
          %p188 = pneg %p131
        $region22: #{tpu_custom_call.1} parent=11 // pred_check_branch
          %190 = sbr.rel (%p188) target = $region24
        $region23: #{tpu_custom_call.1} parent=11 // pred_region
          %s192 = ssub.s32 2048, 2048
          %193 = vsyncadd [#allocation6], %s192
          %s194 = sshll.u32 [#allocation5], 4
          %s195 = int_to_ptr.vmem [resolvable:$true] %s194
          %200 = dma.hbm_to_vmem [thread:$0]  %s4, 2048, %s195, [#allocation6], 64, 64, 4
        $region24: #{tpu_custom_call.1} parent=11 // pred_fallthru
          _
      $region12: #{tpu_custom_call.1} parent=5 // pred_fallthru
        _
      %p201 = scmp.lt.s32.totalorder %s16, 2
      // Predicated region
      $region25: #{tpu_custom_call.1} parent=5 // pred_check
        %p202 = pneg %p201
      $region26: #{tpu_custom_call.1} parent=5 // pred_check_branch
        %204 = sbr.rel (%p202) target = $region28
      $region27: #{tpu_custom_call.1} parent=5 // pred_region
        // Predicated region
        $region29: #{tpu_custom_call.1} parent=27 // pred_check
          %p205 = pneg %p36
        $region30: #{tpu_custom_call.1} parent=27 // pred_check_branch
          %207 = sbr.rel (%p205) target = $region32
        $region31: #{tpu_custom_call.1} parent=27 // pred_region
          %s208 = smul.u32 16, %s16
          %p209 = scmp.lt.s32.totalorder %s208, 31
          %s210 = scalar_select %p209, %s208, 31
          %s211 = smul.addr %s210, 4
          %s212 = scalar_lea.vmem %s0, %s211
          %s213 = smul.u32 16, %s16
        $region32: #{tpu_custom_call.1} parent=27 // pred_fallthru
          _
        // Predicated region
        $region33: #{tpu_custom_call.1} parent=27 // pred_check
          %p214 = pneg %p62
        $region34: #{tpu_custom_call.1} parent=27 // pred_check_branch
          %216 = sbr.rel (%p214) target = $region36
        $region35: #{tpu_custom_call.1} parent=27 // pred_region
          %s217 = smul.u32 16, %s16
          %p218 = scmp.lt.s32.totalorder %s217, 31
          %s219 = scalar_select %p218, %s217, 31
          %s220 = smul.addr %s219, 8
          %s221 = scalar_lea.vmem %s1, %s220
          %s222 = smul.u32 16, %s16
        $region36: #{tpu_custom_call.1} parent=27 // pred_fallthru
          _
      $region28: #{tpu_custom_call.1} parent=5 // pred_fallthru
        _
      %p223 = scmp.le.s32.totalorder 1, %s16
      %p224 = scmp.lt.s32.totalorder %s16, 3
      %p225 = pnand %p223, %p224
      %p226 = pneg %p225
      // Predicated region
      $region37: #{tpu_custom_call.1} parent=5 // pred_check
        _
      $region38: #{tpu_custom_call.1} parent=5 // pred_check_branch
        %228 = sbr.rel (%p225) target = $region40
      $region39: #{tpu_custom_call.1} parent=5 // pred_region
        %s229 = ssub.s32 %s16, 1
        // Predicated region
        $region41: #{tpu_custom_call.1} parent=39 // pred_check
          %p230 = pneg %p89
        $region42: #{tpu_custom_call.1} parent=39 // pred_check_branch
          %232 = sbr.rel (%p230) target = $region44
        $region43: #{tpu_custom_call.1} parent=39 // pred_region
          %233 = dma.done [#allocation3], 256
        $region44: #{tpu_custom_call.1} parent=39 // pred_fallthru
          _
        // Predicated region
        $region45: #{tpu_custom_call.1} parent=39 // pred_check
          %p234 = pneg %p131
        $region46: #{tpu_custom_call.1} parent=39 // pred_check_branch
          %236 = sbr.rel (%p234) target = $region48
        $region47: #{tpu_custom_call.1} parent=39 // pred_region
          %237 = dma.done [#allocation6], 2048
        $region48: #{tpu_custom_call.1} parent=39 // pred_fallthru
          _
        %s238 = smul.u32 16, %s21
        %p239 = scmp.lt.s32.totalorder %s238, 31
        %s240 = scalar_select %p239, %s238, 31
        %s241 = smul.addr %s240, 4
        %s242 = scalar_lea.vmem %s0, %s241
        %p243 = pneg %p42
        %p244 = pneg %p39
        %s245 = smul.u32 16, %s21
        %p246 = scmp.lt.s32.totalorder %s245, 31
        %s247 = scalar_select %p246, %s245, 31
        %s248 = smul.addr %s247, 8
        %s249 = scalar_lea.vmem %s1, %s248
        %p250 = pneg %p68
        %p251 = pneg %p65
        %p252 = pneg %p89
        %p253 = pneg %p86
        %p254 = pneg %p110
        %p255 = pneg %p107
        %p256 = pneg %p131
        %p257 = pneg %p128
        %p258 = pneg %p157
        %p259 = pneg %p154
        %s260 = sand.u32 %s144, 1
        %s261 = scalar_lea.sflag [#allocation4], %s260
        %s262 = sand.u32 %s144, 1
        %s263 = smul.addr %s262, 128
        %s264 = scalar_lea.vmem [#allocation7], %s263
        %s265 = smul.u32 16, %s21
        %p266 = scmp.lt.s32.totalorder %s265, 31
        %s267 = scalar_select %p266, %s265, 31
        %s268 = smul.addr %s267, 4
        %s269 = scalar_lea.vmem %s0, %s268
        %s270 = smul.u32 16, %s21
        %s271 = smul.u32 16, %s21
        %p272 = scmp.lt.s32.totalorder %s271, 31
        %s273 = scalar_select %p272, %s271, 31
        %s274 = smul.addr %s273, 8
        %s275 = scalar_lea.vmem %s1, %s274
        %s276 = smul.u32 16, %s21
        %s277 = smul.u32 16, %s21
        %v279 = vld [vmem:[%s275] sm:$0xff]
        %v280 = vld [vmem:[%s275 + $0x8] sm:$0xff]
        %v281 = vld [vmem:[%s275 + $0x10] sm:$0xff]
        %v282 = vld [vmem:[%s275 + $0x18] sm:$0xff]
        %v283 = vld [vmem:[%s275 + $0x20] sm:$0xff]
        %v284 = vld [vmem:[%s275 + $0x28] sm:$0xff]
        %v285 = vld [vmem:[%s275 + $0x30] sm:$0xff]
        %v286 = vld [vmem:[%s275 + $0x38] sm:$0xff]
        %v287 = vld [vmem:[%s275 + $0x40] sm:$0xff]
        %v288 = vld [vmem:[%s275 + $0x48] sm:$0xff]
        %v289 = vld [vmem:[%s275 + $0x50] sm:$0xff]
        %v290 = vld [vmem:[%s275 + $0x58] sm:$0xff]
        %v291 = vld [vmem:[%s275 + $0x60] sm:$0xff]
        %v292 = vld [vmem:[%s275 + $0x68] sm:$0xff]
        %v293 = vld [vmem:[%s275 + $0x70] sm:$0xff]
        %v294 = vld [vmem:[%s275 + $0x78] sm:$0xff]
        %v295 = vlaneseq
        %v296 = vand.u32 %v295, 127
        %297 = vset.pattern.permute.xlu0 0
        %298 = vperm.xlu0 %297, %v279
        %v299 = vpop.permute.xlu0 %298
        %300 = vset.pattern.permute.xlu0 0
        %301 = vperm.xlu0 %300, %v280
        %v302 = vpop.permute.xlu0 %301
        %303 = vset.pattern.permute.xlu0 0
        %304 = vperm.xlu0 %303, %v281
        %v305 = vpop.permute.xlu0 %304
        %306 = vset.pattern.permute.xlu0 0
        %307 = vperm.xlu0 %306, %v282
        %v308 = vpop.permute.xlu0 %307
        %309 = vset.pattern.permute.xlu0 0
        %310 = vperm.xlu0 %309, %v283
        %v311 = vpop.permute.xlu0 %310
        %312 = vset.pattern.permute.xlu0 0
        %313 = vperm.xlu0 %312, %v284
        %v314 = vpop.permute.xlu0 %313
        %315 = vset.pattern.permute.xlu0 0
        %316 = vperm.xlu0 %315, %v285
        %v317 = vpop.permute.xlu0 %316
        %318 = vset.pattern.permute.xlu0 0
        %319 = vperm.xlu0 %318, %v286
        %v320 = vpop.permute.xlu0 %319
        %321 = vset.pattern.permute.xlu0 0
        %322 = vperm.xlu0 %321, %v287
        %v323 = vpop.permute.xlu0 %322
        %324 = vset.pattern.permute.xlu0 0
        %325 = vperm.xlu0 %324, %v288
        %v326 = vpop.permute.xlu0 %325
        %327 = vset.pattern.permute.xlu0 0
        %328 = vperm.xlu0 %327, %v289
        %v329 = vpop.permute.xlu0 %328
        %330 = vset.pattern.permute.xlu0 0
        %331 = vperm.xlu0 %330, %v290
        %v332 = vpop.permute.xlu0 %331
        %333 = vset.pattern.permute.xlu0 0
        %334 = vperm.xlu0 %333, %v291
        %v335 = vpop.permute.xlu0 %334
        %336 = vset.pattern.permute.xlu0 0
        %337 = vperm.xlu0 %336, %v292
        %v338 = vpop.permute.xlu0 %337
        %339 = vset.pattern.permute.xlu0 0
        %340 = vperm.xlu0 %339, %v293
        %v341 = vpop.permute.xlu0 %340
        %342 = vset.pattern.permute.xlu0 0
        %343 = vperm.xlu0 %342, %v294
        %v344 = vpop.permute.xlu0 %343
        %vm345 = vcmp.eq.s32.totalorder %v299, %v296
        %vm346 = vcmp.eq.s32.totalorder %v302, %v296
        %vm347 = vcmp.eq.s32.totalorder %v305, %v296
        %vm348 = vcmp.eq.s32.totalorder %v308, %v296
        %vm349 = vcmp.eq.s32.totalorder %v311, %v296
        %vm350 = vcmp.eq.s32.totalorder %v314, %v296
        %vm351 = vcmp.eq.s32.totalorder %v317, %v296
        %vm352 = vcmp.eq.s32.totalorder %v320, %v296
        %vm353 = vcmp.eq.s32.totalorder %v323, %v296
        %vm354 = vcmp.eq.s32.totalorder %v326, %v296
        %vm355 = vcmp.eq.s32.totalorder %v329, %v296
        %vm356 = vcmp.eq.s32.totalorder %v332, %v296
        %vm357 = vcmp.eq.s32.totalorder %v335, %v296
        %vm358 = vcmp.eq.s32.totalorder %v338, %v296
        %vm359 = vcmp.eq.s32.totalorder %v341, %v296
        %vm360 = vcmp.eq.s32.totalorder %v344, %v296
        %v361 = vsel %vm345, 1, 0
        %v362 = vsel %vm346, 1, 0
        %v363 = vsel %vm347, 1, 0
        %v364 = vsel %vm348, 1, 0
        %v365 = vsel %vm349, 1, 0
        %v366 = vsel %vm350, 1, 0
        %v367 = vsel %vm351, 1, 0
        %v368 = vsel %vm352, 1, 0
        %v369 = vsel %vm353, 1, 0
        %v370 = vsel %vm354, 1, 0
        %v371 = vsel %vm355, 1, 0
        %v372 = vsel %vm356, 1, 0
        %v373 = vsel %vm357, 1, 0
        %v374 = vsel %vm358, 1, 0
        %v375 = vsel %vm359, 1, 0
        %v376 = vsel %vm360, 1, 0
        %v377 = vcvt.s32.f32 %v361
        %v378 = vcvt.s32.f32 %v362
        %v379 = vcvt.s32.f32 %v363
        %v380 = vcvt.s32.f32 %v364
        %v381 = vcvt.s32.f32 %v365
        %v382 = vcvt.s32.f32 %v366
        %v383 = vcvt.s32.f32 %v367
        %v384 = vcvt.s32.f32 %v368
        %v385 = vcvt.s32.f32 %v369
        %v386 = vcvt.s32.f32 %v370
        %v387 = vcvt.s32.f32 %v371
        %v388 = vcvt.s32.f32 %v372
        %v389 = vcvt.s32.f32 %v373
        %v390 = vcvt.s32.f32 %v374
        %v391 = vcvt.s32.f32 %v375
        %v392 = vcvt.s32.f32 %v376
        %v393 = vpack.c.bf16 %v378, %v377
        %v394 = vpack.c.bf16 %v380, %v379
        %v395 = vpack.c.bf16 %v382, %v381
        %v396 = vpack.c.bf16 %v384, %v383
        %v397 = vpack.c.bf16 %v386, %v385
        %v398 = vpack.c.bf16 %v388, %v387
        %v399 = vpack.c.bf16 %v390, %v389
        %v400 = vpack.c.bf16 %v392, %v391
        %v401 = vld [vmem:[#allocation2] sm:$0xff]
        %v402 = vld [vmem:[#allocation2 + $0x8] sm:$0xff]
        %v405 = vunpack.c.l.b16 %v401
        %v406 = vunpack.c.h.b16 %v401
        %v407 = vunpack.c.l.b16 %v402
        %v408 = vunpack.c.h.b16 %v402
        %v409 = vpack.c.b16 %v407, %v405
        %v410 = vpack.c.b16 %v408, %v406
        %vm413 = vcmask 130048
        %v415 = vsel %vm413, %v393, 0
        %v418 = vsel %vm413, %v394, 0
        %v421 = vsel %vm413, %v395, 0
        %v424 = vsel %vm413, %v396, 0
        %v427 = vsel %vm413, %v397, 0
        %v430 = vsel %vm413, %v398, 0
        %v433 = vsel %vm413, %v399, 0
        %v436 = vsel %vm413, %v400, 0
        %438 = vmatprep.subr.bf16.mxu0 %v410
        %439 = vmatpush1.bf16.msra.mxu0 %v409
        %440 = vmatprep.subr.bf16.mxu0 0
        %441 = vmatpush1.bf16.msra.mxu0 0
        %442 = vmatprep.subr.bf16.mxu0 0
        %443 = vmatpush1.bf16.msra.mxu0 0
        %444 = vmatprep.subr.bf16.mxu0 0
        %445 = vmatpush1.bf16.msra.mxu0 0
        %446 = vmatprep.subr.bf16.mxu0 0
        %447 = vmatpush1.bf16.msra.mxu0 0
        %448 = vmatprep.subr.bf16.mxu0 0
        %449 = vmatpush1.bf16.msra.mxu0 0
        %450 = vmatprep.subr.bf16.mxu0 0
        %451 = vmatpush1.bf16.msra.mxu0 0
        %452 = vmatprep.subr.bf16.mxu0 0
        %453 = vmatpush1.bf16.msra.mxu0 0
        %454 = vmatprep.subr.bf16.mxu0 0
        %455 = vmatpush1.bf16.msra.mxu0 0
        %456 = vmatprep.subr.bf16.mxu0 0
        %457 = vmatpush1.bf16.msra.mxu0 0
        %458 = vmatprep.subr.bf16.mxu0 0
        %459 = vmatpush1.bf16.msra.mxu0 0
        %460 = vmatprep.subr.bf16.mxu0 0
        %461 = vmatpush1.bf16.msra.mxu0 0
        %462 = vmatprep.subr.bf16.mxu0 0
        %463 = vmatpush1.bf16.msra.mxu0 0
        %464 = vmatprep.subr.bf16.mxu0 0
        %465 = vmatpush1.bf16.msra.mxu0 0
        %466 = vmatprep.subr.bf16.mxu0 0
        %467 = vmatpush1.bf16.msra.mxu0 0
        %468 = vmatprep.subr.bf16.mxu0 0
        %469 = vmatpush1.bf16.msra.mxu0 0
        %470 = vmatprep.mubr.bf16.mxu0 0
        %471 = vmatmul.mubr.bf16.gmra.mrb[0].mxu0 %v415
        %v472 = vpop.f32.mrb[0].mxu0
        %v473 = vadd.f32 0.0, %v472
        %v474 = vpop.f32.mrb[0].mxu0
        %v475 = vadd.f32 0.0, %v474
        %v476 = vpop.f32.mrb[0].mxu0
        %v477 = vadd.f32 0.0, %v476
        %v478 = vpop.f32.mrb[0].mxu0
        %v479 = vadd.f32 0.0, %v478
        %480 = vmatprep.mubr.bf16.mxu0 0
        %481 = vmatmul.mubr.bf16.gmra.mrb[0].mxu0 %v418
        %v482 = vpop.f32.mrb[0].mxu0
        %v483 = vadd.f32 0.0, %v482
        %v484 = vpop.f32.mrb[0].mxu0
        %v485 = vadd.f32 0.0, %v484
        %v486 = vpop.f32.mrb[0].mxu0
        %v487 = vadd.f32 0.0, %v486
        %v488 = vpop.f32.mrb[0].mxu0
        %v489 = vadd.f32 0.0, %v488
        %490 = vmatprep.mubr.bf16.mxu0 0
        %491 = vmatmul.mubr.bf16.gmra.mrb[0].mxu0 %v421
        %v492 = vpop.f32.mrb[0].mxu0
        %v493 = vadd.f32 0.0, %v492
        %v494 = vpop.f32.mrb[0].mxu0
        %v495 = vadd.f32 0.0, %v494
        %v496 = vpop.f32.mrb[0].mxu0
        %v497 = vadd.f32 0.0, %v496
        %v498 = vpop.f32.mrb[0].mxu0
        %v499 = vadd.f32 0.0, %v498
        %500 = vmatprep.mubr.bf16.mxu0 0
        %501 = vmatmul.mubr.bf16.gmra.mrb[0].mxu0 %v424
        %v502 = vpop.f32.mrb[0].mxu0
        %v503 = vadd.f32 0.0, %v502
        %v504 = vpop.f32.mrb[0].mxu0
        %v505 = vadd.f32 0.0, %v504
        %v506 = vpop.f32.mrb[0].mxu0
        %v507 = vadd.f32 0.0, %v506
        %v508 = vpop.f32.mrb[0].mxu0
        %v509 = vadd.f32 0.0, %v508
        %510 = vmatprep.mubr.bf16.mxu0 0
        %511 = vmatmul.mubr.bf16.gmra.mrb[0].mxu0 %v427
        %v512 = vpop.f32.mrb[0].mxu0
        %v513 = vadd.f32 0.0, %v512
        %v514 = vpop.f32.mrb[0].mxu0
        %v515 = vadd.f32 0.0, %v514
        %v516 = vpop.f32.mrb[0].mxu0
        %v517 = vadd.f32 0.0, %v516
        %v518 = vpop.f32.mrb[0].mxu0
        %v519 = vadd.f32 0.0, %v518
        %520 = vmatprep.mubr.bf16.mxu0 0
        %521 = vmatmul.mubr.bf16.gmra.mrb[0].mxu0 %v430
        %v522 = vpop.f32.mrb[0].mxu0
        %v523 = vadd.f32 0.0, %v522
        %v524 = vpop.f32.mrb[0].mxu0
        %v525 = vadd.f32 0.0, %v524
        %v526 = vpop.f32.mrb[0].mxu0
        %v527 = vadd.f32 0.0, %v526
        %v528 = vpop.f32.mrb[0].mxu0
        %v529 = vadd.f32 0.0, %v528
        %530 = vmatprep.mubr.bf16.mxu0 0
        %531 = vmatmul.mubr.bf16.gmra.mrb[0].mxu0 %v433
        %v532 = vpop.f32.mrb[0].mxu0
        %v533 = vadd.f32 0.0, %v532
        %v534 = vpop.f32.mrb[0].mxu0
        %v535 = vadd.f32 0.0, %v534
        %v536 = vpop.f32.mrb[0].mxu0
        %v537 = vadd.f32 0.0, %v536
        %v538 = vpop.f32.mrb[0].mxu0
        %v539 = vadd.f32 0.0, %v538
        %540 = vmatprep.mubr.bf16.mxu0 0
        %541 = vmatmul.mubr.bf16.gmra.mrb[0].mxu0 %v436
        %v542 = vpop.f32.mrb[0].mxu0
        %v543 = vadd.f32 0.0, %v542
        %v544 = vpop.f32.mrb[0].mxu0
        %v545 = vadd.f32 0.0, %v544
        %v546 = vpop.f32.mrb[0].mxu0
        %v547 = vadd.f32 0.0, %v546
        %v548 = vpop.f32.mrb[0].mxu0
        %v549 = vadd.f32 0.0, %v548
        %550 = vdwg.mxu0
        %v551 = vld [vmem:[%s269] sm:$0xf]
        %v552 = vld [vmem:[%s269 + $0x4] sm:$0xf]
        %v553 = vld [vmem:[%s269 + $0x8] sm:$0xf]
        %v554 = vld [vmem:[%s269 + $0xc] sm:$0xf]
        %v555 = vld [vmem:[%s269 + $0x10] sm:$0xf]
        %v556 = vld [vmem:[%s269 + $0x14] sm:$0xf]
        %v557 = vld [vmem:[%s269 + $0x18] sm:$0xf]
        %v558 = vld [vmem:[%s269 + $0x1c] sm:$0xf]
        %v559 = vld [vmem:[%s269 + $0x20] sm:$0xf]
        %v560 = vld [vmem:[%s269 + $0x24] sm:$0xf]
        %v561 = vld [vmem:[%s269 + $0x28] sm:$0xf]
        %v562 = vld [vmem:[%s269 + $0x2c] sm:$0xf]
        %v563 = vld [vmem:[%s269 + $0x30] sm:$0xf]
        %v564 = vld [vmem:[%s269 + $0x34] sm:$0xf]
        %v565 = vld [vmem:[%s269 + $0x38] sm:$0xf]
        %v566 = vld [vmem:[%s269 + $0x3c] sm:$0xf]
        %v567 = vld [vmem:[%s3] sm:$0xff]
        %v568 = vld [vmem:[%s3 + $0x8] sm:$0xff]
        %v569 = vld [vmem:[%s3 + $0x10] sm:$0xff]
        %v570 = vld [vmem:[%s3 + $0x18] sm:$0xff]
        %v571 = vld [vmem:[%s3 + $0x20] sm:$0xff]
        %v572 = vld [vmem:[%s3 + $0x28] sm:$0xff]
        %v573 = vld [vmem:[%s3 + $0x30] sm:$0xff]
        %v574 = vld [vmem:[%s3 + $0x38] sm:$0xff]
        %v575 = vld [vmem:[%s3 + $0x40] sm:$0xff]
        %v576 = vld [vmem:[%s3 + $0x48] sm:$0xff]
        %v577 = vld [vmem:[%s3 + $0x50] sm:$0xff]
        %v578 = vld [vmem:[%s3 + $0x58] sm:$0xff]
        %v579 = vld [vmem:[%s3 + $0x60] sm:$0xff]
        %v580 = vld [vmem:[%s3 + $0x68] sm:$0xff]
        %v581 = vld [vmem:[%s3 + $0x70] sm:$0xff]
        %v582 = vld [vmem:[%s3 + $0x78] sm:$0xff]
        %v599 = vunpack.c.l.b16 %v551
        %v600 = vunpack.c.l.b16 %v552
        %v601 = vunpack.c.l.b16 %v553
        %v602 = vunpack.c.l.b16 %v554
        %v603 = vunpack.c.l.b16 %v555
        %v604 = vunpack.c.l.b16 %v556
        %v605 = vunpack.c.l.b16 %v557
        %v606 = vunpack.c.l.b16 %v558
        %v607 = vunpack.c.l.b16 %v559
        %v608 = vunpack.c.l.b16 %v560
        %v609 = vunpack.c.l.b16 %v561
        %v610 = vunpack.c.l.b16 %v562
        %v611 = vunpack.c.l.b16 %v563
        %v612 = vunpack.c.l.b16 %v564
        %v613 = vunpack.c.l.b16 %v565
        %v614 = vunpack.c.l.b16 %v566
        %v615 = vpack.c.b16 %v600, %v599
        %v616 = vpack.c.b16 %v602, %v601
        %v617 = vpack.c.b16 %v604, %v603
        %v618 = vpack.c.b16 %v606, %v605
        %v619 = vpack.c.b16 %v608, %v607
        %v620 = vpack.c.b16 %v610, %v609
        %v621 = vpack.c.b16 %v612, %v611
        %v622 = vpack.c.b16 %v614, %v613
        %v647 = vunpack.c.l.b16 %v567
        %v648 = vunpack.c.h.b16 %v567
        %v649 = vunpack.c.l.b16 %v568
        %v650 = vunpack.c.h.b16 %v568
        %v651 = vunpack.c.l.b16 %v569
        %v652 = vunpack.c.h.b16 %v569
        %v653 = vunpack.c.l.b16 %v570
        %v654 = vunpack.c.h.b16 %v570
        %v655 = vunpack.c.l.b16 %v571
        %v656 = vunpack.c.h.b16 %v571
        %v657 = vunpack.c.l.b16 %v572
        %v658 = vunpack.c.h.b16 %v572
        %v659 = vunpack.c.l.b16 %v573
        %v660 = vunpack.c.h.b16 %v573
        %v661 = vunpack.c.l.b16 %v574
        %v662 = vunpack.c.h.b16 %v574
        %v663 = vunpack.c.l.b16 %v575
        %v664 = vunpack.c.h.b16 %v575
        %v665 = vunpack.c.l.b16 %v576
        %v666 = vunpack.c.h.b16 %v576
        %v667 = vunpack.c.l.b16 %v577
        %v668 = vunpack.c.h.b16 %v577
        %v669 = vunpack.c.l.b16 %v578
        %v670 = vunpack.c.h.b16 %v578
        %v671 = vunpack.c.l.b16 %v579
        %v672 = vunpack.c.h.b16 %v579
        %v673 = vunpack.c.l.b16 %v580
        %v674 = vunpack.c.h.b16 %v580
        %v675 = vunpack.c.l.b16 %v581
        %v676 = vunpack.c.h.b16 %v581
        %v677 = vunpack.c.l.b16 %v582
        %v678 = vunpack.c.h.b16 %v582
        %v679 = vpack.c.b16 %v649, %v647
        %v680 = vpack.c.b16 %v650, %v648
        %v681 = vpack.c.b16 %v653, %v651
        %v682 = vpack.c.b16 %v654, %v652
        %v683 = vpack.c.b16 %v657, %v655
        %v684 = vpack.c.b16 %v658, %v656
        %v685 = vpack.c.b16 %v661, %v659
        %v686 = vpack.c.b16 %v662, %v660
        %v687 = vpack.c.b16 %v665, %v663
        %v688 = vpack.c.b16 %v666, %v664
        %v689 = vpack.c.b16 %v669, %v667
        %v690 = vpack.c.b16 %v670, %v668
        %v691 = vpack.c.b16 %v673, %v671
        %v692 = vpack.c.b16 %v674, %v672
        %v693 = vpack.c.b16 %v677, %v675
        %v694 = vpack.c.b16 %v678, %v676
        %711 = vmatprep.subr.bf16.mxu0 %v680
        %712 = vmatpush1.bf16.msra.mxu0 %v679
        %713 = vmatprep.subr.bf16.mxu0 %v682
        %714 = vmatpush1.bf16.msra.mxu0 %v681
        %715 = vmatprep.subr.bf16.mxu0 %v684
        %716 = vmatpush1.bf16.msra.mxu0 %v683
        %717 = vmatprep.subr.bf16.mxu0 %v686
        %718 = vmatpush1.bf16.msra.mxu0 %v685
        %719 = vmatprep.subr.bf16.mxu0 %v688
        %720 = vmatpush1.bf16.msra.mxu0 %v687
        %721 = vmatprep.subr.bf16.mxu0 %v690
        %722 = vmatpush1.bf16.msra.mxu0 %v689
        %723 = vmatprep.subr.bf16.mxu0 %v692
        %724 = vmatpush1.bf16.msra.mxu0 %v691
        %725 = vmatprep.subr.bf16.mxu0 %v694
        %726 = vmatpush1.bf16.msra.mxu0 %v693
        %727 = vmatprep.subr.bf16.mxu0 0
        %728 = vmatpush1.bf16.msra.mxu0 0
        %729 = vmatprep.subr.bf16.mxu0 0
        %730 = vmatpush1.bf16.msra.mxu0 0
        %731 = vmatprep.subr.bf16.mxu0 0
        %732 = vmatpush1.bf16.msra.mxu0 0
        %733 = vmatprep.subr.bf16.mxu0 0
        %734 = vmatpush1.bf16.msra.mxu0 0
        %735 = vmatprep.subr.bf16.mxu0 0
        %736 = vmatpush1.bf16.msra.mxu0 0
        %737 = vmatprep.subr.bf16.mxu0 0
        %738 = vmatpush1.bf16.msra.mxu0 0
        %739 = vmatprep.subr.bf16.mxu0 0
        %740 = vmatpush1.bf16.msra.mxu0 0
        %741 = vmatprep.subr.bf16.mxu0 0
        %742 = vmatpush1.bf16.msra.mxu0 0
        %743 = vmatprep.mubr.bf16.mxu0 0
        %744 = vmatmul.mubr.bf16.gmra.mrb[0].mxu0 %v615
        %v745 = vpop.f32.mrb[0].mxu0
        %v746 = vadd.f32 %v473, %v745
        %v747 = vpop.f32.mrb[0].mxu0
        %v748 = vadd.f32 %v475, %v747
        %v749 = vpop.f32.mrb[0].mxu0
        %v750 = vadd.f32 %v477, %v749
        %v751 = vpop.f32.mrb[0].mxu0
        %v752 = vadd.f32 %v479, %v751
        %753 = vmatprep.mubr.bf16.mxu0 0
        %754 = vmatmul.mubr.bf16.gmra.mrb[0].mxu0 %v616
        %v755 = vpop.f32.mrb[0].mxu0
        %v756 = vadd.f32 %v483, %v755
        %v757 = vpop.f32.mrb[0].mxu0
        %v758 = vadd.f32 %v485, %v757
        %v759 = vpop.f32.mrb[0].mxu0
        %v760 = vadd.f32 %v487, %v759
        %v761 = vpop.f32.mrb[0].mxu0
        %v762 = vadd.f32 %v489, %v761
        %763 = vmatprep.mubr.bf16.mxu0 0
        %764 = vmatmul.mubr.bf16.gmra.mrb[0].mxu0 %v617
        %v765 = vpop.f32.mrb[0].mxu0
        %v766 = vadd.f32 %v493, %v765
        %v767 = vpop.f32.mrb[0].mxu0
        %v768 = vadd.f32 %v495, %v767
        %v769 = vpop.f32.mrb[0].mxu0
        %v770 = vadd.f32 %v497, %v769
        %v771 = vpop.f32.mrb[0].mxu0
        %v772 = vadd.f32 %v499, %v771
        %773 = vmatprep.mubr.bf16.mxu0 0
        %774 = vmatmul.mubr.bf16.gmra.mrb[0].mxu0 %v618
        %v775 = vpop.f32.mrb[0].mxu0
        %v776 = vadd.f32 %v503, %v775
        %v777 = vpop.f32.mrb[0].mxu0
        %v778 = vadd.f32 %v505, %v777
        %v779 = vpop.f32.mrb[0].mxu0
        %v780 = vadd.f32 %v507, %v779
        %v781 = vpop.f32.mrb[0].mxu0
        %v782 = vadd.f32 %v509, %v781
        %783 = vmatprep.mubr.bf16.mxu0 0
        %784 = vmatmul.mubr.bf16.gmra.mrb[0].mxu0 %v619
        %v785 = vpop.f32.mrb[0].mxu0
        %v786 = vadd.f32 %v513, %v785
        %v787 = vpop.f32.mrb[0].mxu0
        %v788 = vadd.f32 %v515, %v787
        %v789 = vpop.f32.mrb[0].mxu0
        %v790 = vadd.f32 %v517, %v789
        %v791 = vpop.f32.mrb[0].mxu0
        %v792 = vadd.f32 %v519, %v791
        %793 = vmatprep.mubr.bf16.mxu0 0
        %794 = vmatmul.mubr.bf16.gmra.mrb[0].mxu0 %v620
        %v795 = vpop.f32.mrb[0].mxu0
        %v796 = vadd.f32 %v523, %v795
        %v797 = vpop.f32.mrb[0].mxu0
        %v798 = vadd.f32 %v525, %v797
        %v799 = vpop.f32.mrb[0].mxu0
        %v800 = vadd.f32 %v527, %v799
        %v801 = vpop.f32.mrb[0].mxu0
        %v802 = vadd.f32 %v529, %v801
        %803 = vmatprep.mubr.bf16.mxu0 0
        %804 = vmatmul.mubr.bf16.gmra.mrb[0].mxu0 %v621
        %v805 = vpop.f32.mrb[0].mxu0
        %v806 = vadd.f32 %v533, %v805
        %v807 = vpop.f32.mrb[0].mxu0
        %v808 = vadd.f32 %v535, %v807
        %v809 = vpop.f32.mrb[0].mxu0
        %v810 = vadd.f32 %v537, %v809
        %v811 = vpop.f32.mrb[0].mxu0
        %v812 = vadd.f32 %v539, %v811
        %813 = vmatprep.mubr.bf16.mxu0 0
        %814 = vmatmul.mubr.bf16.gmra.mrb[0].mxu0 %v622
        %v815 = vpop.f32.mrb[0].mxu0
        %v816 = vadd.f32 %v543, %v815
        %v817 = vpop.f32.mrb[0].mxu0
        %v818 = vadd.f32 %v545, %v817
        %v819 = vpop.f32.mrb[0].mxu0
        %v820 = vadd.f32 %v547, %v819
        %v821 = vpop.f32.mrb[0].mxu0
        %v822 = vadd.f32 %v549, %v821
        %823 = vdwg.mxu0
        %v824 = vtanh.pop %v746
        %v825 = vtanh.pop %v748
        %v826 = vtanh.pop %v750
        %v827 = vtanh.pop %v752
        %v828 = vtanh.pop %v756
        %v829 = vtanh.pop %v758
        %v830 = vtanh.pop %v760
        %v831 = vtanh.pop %v762
        %v832 = vtanh.pop %v766
        %v833 = vtanh.pop %v768
        %v834 = vtanh.pop %v770
        %v835 = vtanh.pop %v772
        %v836 = vtanh.pop %v776
        %v837 = vtanh.pop %v778
        %v838 = vtanh.pop %v780
        %v839 = vtanh.pop %v782
        %v840 = vtanh.pop %v786
        %v841 = vtanh.pop %v788
        %v842 = vtanh.pop %v790
        %v843 = vtanh.pop %v792
        %v844 = vtanh.pop %v796
        %v845 = vtanh.pop %v798
        %v846 = vtanh.pop %v800
        %v847 = vtanh.pop %v802
        %v848 = vtanh.pop %v806
        %v849 = vtanh.pop %v808
        %v850 = vtanh.pop %v810
        %v851 = vtanh.pop %v812
        %v852 = vtanh.pop %v816
        %v853 = vtanh.pop %v818
        %v854 = vtanh.pop %v820
        %v855 = vtanh.pop %v822
        %v856 = vmul.f32 %v824, %v824
        %v857 = vmul.f32 %v825, %v825
        %v858 = vmul.f32 %v826, %v826
        %v859 = vmul.f32 %v827, %v827
        %v860 = vmul.f32 %v828, %v828
        %v861 = vmul.f32 %v829, %v829
        %v862 = vmul.f32 %v830, %v830
        %v863 = vmul.f32 %v831, %v831
        %v864 = vmul.f32 %v832, %v832
        %v865 = vmul.f32 %v833, %v833
        %v866 = vmul.f32 %v834, %v834
        %v867 = vmul.f32 %v835, %v835
        %v868 = vmul.f32 %v836, %v836
        %v869 = vmul.f32 %v837, %v837
        %v870 = vmul.f32 %v838, %v838
        %v871 = vmul.f32 %v839, %v839
        %v872 = vmul.f32 %v840, %v840
        %v873 = vmul.f32 %v841, %v841
        %v874 = vmul.f32 %v842, %v842
        %v875 = vmul.f32 %v843, %v843
        %v876 = vmul.f32 %v844, %v844
        %v877 = vmul.f32 %v845, %v845
        %v878 = vmul.f32 %v846, %v846
        %v879 = vmul.f32 %v847, %v847
        %v880 = vmul.f32 %v848, %v848
        %v881 = vmul.f32 %v849, %v849
        %v882 = vmul.f32 %v850, %v850
        %v883 = vmul.f32 %v851, %v851
        %v884 = vmul.f32 %v852, %v852
        %v885 = vmul.f32 %v853, %v853
        %v886 = vmul.f32 %v854, %v854
        %v887 = vmul.f32 %v855, %v855
        %v888 = vsub.f32 1.0, %v856
        %v889 = vsub.f32 1.0, %v857
        %v890 = vsub.f32 1.0, %v858
        %v891 = vsub.f32 1.0, %v859
        %v892 = vsub.f32 1.0, %v860
        %v893 = vsub.f32 1.0, %v861
        %v894 = vsub.f32 1.0, %v862
        %v895 = vsub.f32 1.0, %v863
        %v896 = vsub.f32 1.0, %v864
        %v897 = vsub.f32 1.0, %v865
        %v898 = vsub.f32 1.0, %v866
        %v899 = vsub.f32 1.0, %v867
        %v900 = vsub.f32 1.0, %v868
        %v901 = vsub.f32 1.0, %v869
        %v902 = vsub.f32 1.0, %v870
        %v903 = vsub.f32 1.0, %v871
        %v904 = vsub.f32 1.0, %v872
        %v905 = vsub.f32 1.0, %v873
        %v906 = vsub.f32 1.0, %v874
        %v907 = vsub.f32 1.0, %v875
        %v908 = vsub.f32 1.0, %v876
        %v909 = vsub.f32 1.0, %v877
        %v910 = vsub.f32 1.0, %v878
        %v911 = vsub.f32 1.0, %v879
        %v912 = vsub.f32 1.0, %v880
        %v913 = vsub.f32 1.0, %v881
        %v914 = vsub.f32 1.0, %v882
        %v915 = vsub.f32 1.0, %v883
        %v916 = vsub.f32 1.0, %v884
        %v917 = vsub.f32 1.0, %v885
        %v918 = vsub.f32 1.0, %v886
        %v919 = vsub.f32 1.0, %v887
        %v920 = vpack.c.bf16 %v890, %v888
        %v921 = vpack.c.bf16 %v891, %v889
        %v922 = vpack.c.bf16 %v894, %v892
        %v923 = vpack.c.bf16 %v895, %v893
        %v924 = vpack.c.bf16 %v898, %v896
        %v925 = vpack.c.bf16 %v899, %v897
        %v926 = vpack.c.bf16 %v902, %v900
        %v927 = vpack.c.bf16 %v903, %v901
        %v928 = vpack.c.bf16 %v906, %v904
        %v929 = vpack.c.bf16 %v907, %v905
        %v930 = vpack.c.bf16 %v910, %v908
        %v931 = vpack.c.bf16 %v911, %v909
        %v932 = vpack.c.bf16 %v914, %v912
        %v933 = vpack.c.bf16 %v915, %v913
        %v934 = vpack.c.bf16 %v918, %v916
        %v935 = vpack.c.bf16 %v919, %v917
        %v936 = vld [vmem:[#allocation5] sm:$0xf]
        %v937 = vld [vmem:[#allocation5 + $0x4] sm:$0xf]
        %v938 = vld [vmem:[#allocation5 + $0x8] sm:$0xf]
        %v939 = vld [vmem:[#allocation5 + $0xc] sm:$0xf]
        %v940 = vld [vmem:[#allocation5 + $0x10] sm:$0xf]
        %v941 = vld [vmem:[#allocation5 + $0x14] sm:$0xf]
        %v942 = vld [vmem:[#allocation5 + $0x18] sm:$0xf]
        %v943 = vld [vmem:[#allocation5 + $0x1c] sm:$0xf]
        %v944 = vld [vmem:[#allocation5 + $0x20] sm:$0xf]
        %v945 = vld [vmem:[#allocation5 + $0x24] sm:$0xf]
        %v946 = vld [vmem:[#allocation5 + $0x28] sm:$0xf]
        %v947 = vld [vmem:[#allocation5 + $0x2c] sm:$0xf]
        %v948 = vld [vmem:[#allocation5 + $0x30] sm:$0xf]
        %v949 = vld [vmem:[#allocation5 + $0x34] sm:$0xf]
        %v950 = vld [vmem:[#allocation5 + $0x38] sm:$0xf]
        %v951 = vld [vmem:[#allocation5 + $0x3c] sm:$0xf]
        %v952 = vld [vmem:[#allocation5 + $0x40] sm:$0xf]
        %v953 = vld [vmem:[#allocation5 + $0x44] sm:$0xf]
        %v954 = vld [vmem:[#allocation5 + $0x48] sm:$0xf]
        %v955 = vld [vmem:[#allocation5 + $0x4c] sm:$0xf]
        %v956 = vld [vmem:[#allocation5 + $0x50] sm:$0xf]
        %v957 = vld [vmem:[#allocation5 + $0x54] sm:$0xf]
        %v958 = vld [vmem:[#allocation5 + $0x58] sm:$0xf]
        %v959 = vld [vmem:[#allocation5 + $0x5c] sm:$0xf]
        %v960 = vld [vmem:[#allocation5 + $0x60] sm:$0xf]
        %v961 = vld [vmem:[#allocation5 + $0x64] sm:$0xf]
        %v962 = vld [vmem:[#allocation5 + $0x68] sm:$0xf]
        %v963 = vld [vmem:[#allocation5 + $0x6c] sm:$0xf]
        %v964 = vld [vmem:[#allocation5 + $0x70] sm:$0xf]
        %v965 = vld [vmem:[#allocation5 + $0x74] sm:$0xf]
        %v966 = vld [vmem:[#allocation5 + $0x78] sm:$0xf]
        %v967 = vld [vmem:[#allocation5 + $0x7c] sm:$0xf]
        %v1000 = vunpack.c.l.b16 %v936
        %v1001 = vunpack.c.l.b16 %v937
        %v1002 = vunpack.c.l.b16 %v938
        %v1003 = vunpack.c.l.b16 %v939
        %v1004 = vunpack.c.l.b16 %v940
        %v1005 = vunpack.c.l.b16 %v941
        %v1006 = vunpack.c.l.b16 %v942
        %v1007 = vunpack.c.l.b16 %v943
        %v1008 = vunpack.c.l.b16 %v944
        %v1009 = vunpack.c.l.b16 %v945
        %v1010 = vunpack.c.l.b16 %v946
        %v1011 = vunpack.c.l.b16 %v947
        %v1012 = vunpack.c.l.b16 %v948
        %v1013 = vunpack.c.l.b16 %v949
        %v1014 = vunpack.c.l.b16 %v950
        %v1015 = vunpack.c.l.b16 %v951
        %v1016 = vunpack.c.l.b16 %v952
        %v1017 = vunpack.c.l.b16 %v953
        %v1018 = vunpack.c.l.b16 %v954
        %v1019 = vunpack.c.l.b16 %v955
        %v1020 = vunpack.c.l.b16 %v956
        %v1021 = vunpack.c.l.b16 %v957
        %v1022 = vunpack.c.l.b16 %v958
        %v1023 = vunpack.c.l.b16 %v959
        %v1024 = vunpack.c.l.b16 %v960
        %v1025 = vunpack.c.l.b16 %v961
        %v1026 = vunpack.c.l.b16 %v962
        %v1027 = vunpack.c.l.b16 %v963
        %v1028 = vunpack.c.l.b16 %v964
        %v1029 = vunpack.c.l.b16 %v965
        %v1030 = vunpack.c.l.b16 %v966
        %v1031 = vunpack.c.l.b16 %v967
        %v1032 = vpack.c.b16 %v1001, %v1000
        %v1033 = vpack.c.b16 %v1003, %v1002
        %v1034 = vpack.c.b16 %v1005, %v1004
        %v1035 = vpack.c.b16 %v1007, %v1006
        %v1036 = vpack.c.b16 %v1009, %v1008
        %v1037 = vpack.c.b16 %v1011, %v1010
        %v1038 = vpack.c.b16 %v1013, %v1012
        %v1039 = vpack.c.b16 %v1015, %v1014
        %v1040 = vpack.c.b16 %v1017, %v1016
        %v1041 = vpack.c.b16 %v1019, %v1018
        %v1042 = vpack.c.b16 %v1021, %v1020
        %v1043 = vpack.c.b16 %v1023, %v1022
        %v1044 = vpack.c.b16 %v1025, %v1024
        %v1045 = vpack.c.b16 %v1027, %v1026
        %v1046 = vpack.c.b16 %v1029, %v1028
        %v1047 = vpack.c.b16 %v1031, %v1030
        %1064 = vmatprep.subr.bf16.mxu0 0
        %1065 = vmatpush1.bf16.msra.mxu0 %v1032
        %1066 = vmatprep.subr.bf16.mxu0 0
        %1067 = vmatpush1.bf16.msra.mxu0 %v1033
        %1068 = vmatprep.subr.bf16.mxu0 0
        %1069 = vmatpush1.bf16.msra.mxu0 %v1034
        %1070 = vmatprep.subr.bf16.mxu0 0
        %1071 = vmatpush1.bf16.msra.mxu0 %v1035
        %1072 = vmatprep.subr.bf16.mxu0 0
        %1073 = vmatpush1.bf16.msra.mxu0 %v1036
        %1074 = vmatprep.subr.bf16.mxu0 0
        %1075 = vmatpush1.bf16.msra.mxu0 %v1037
        %1076 = vmatprep.subr.bf16.mxu0 0
        %1077 = vmatpush1.bf16.msra.mxu0 %v1038
        %1078 = vmatprep.subr.bf16.mxu0 0
        %1079 = vmatpush1.bf16.msra.mxu0 %v1039
        %1080 = vmatprep.subr.bf16.mxu0 0
        %1081 = vmatpush1.bf16.msra.mxu0 %v1040
        %1082 = vmatprep.subr.bf16.mxu0 0
        %1083 = vmatpush1.bf16.msra.mxu0 %v1041
        %1084 = vmatprep.subr.bf16.mxu0 0
        %1085 = vmatpush1.bf16.msra.mxu0 %v1042
        %1086 = vmatprep.subr.bf16.mxu0 0
        %1087 = vmatpush1.bf16.msra.mxu0 %v1043
        %1088 = vmatprep.subr.bf16.mxu0 0
        %1089 = vmatpush1.bf16.msra.mxu0 %v1044
        %1090 = vmatprep.subr.bf16.mxu0 0
        %1091 = vmatpush1.bf16.msra.mxu0 %v1045
        %1092 = vmatprep.subr.bf16.mxu0 0
        %1093 = vmatpush1.bf16.msra.mxu0 %v1046
        %1094 = vmatprep.subr.bf16.mxu0 0
        %1095 = vmatpush1.bf16.msra.mxu0 %v1047
        %1096 = vmatprep.mubr.bf16.mxu0 %v921
        %1097 = vmatmul.mubr.bf16.gmra.mrb[0].mxu0 %v920
        %v1098 = vpop.f32.mrb[0].mxu0
        %v1099 = vadd.f32 0.0, %v1098
        %v1100 = vpop.f32.mrb[0].mxu0
        %v1101 = vpop.f32.mrb[0].mxu0
        %v1102 = vadd.f32 0.0, %v1101
        %v1103 = vpop.f32.mrb[0].mxu0
        %1104 = vmatprep.mubr.bf16.mxu0 %v923
        %1105 = vmatmul.mubr.bf16.gmra.mrb[0].mxu0 %v922
        %v1106 = vpop.f32.mrb[0].mxu0
        %v1107 = vadd.f32 0.0, %v1106
        %v1108 = vpop.f32.mrb[0].mxu0
        %v1109 = vpop.f32.mrb[0].mxu0
        %v1110 = vadd.f32 0.0, %v1109
        %v1111 = vpop.f32.mrb[0].mxu0
        %1112 = vmatprep.mubr.bf16.mxu0 %v925
        %1113 = vmatmul.mubr.bf16.gmra.mrb[0].mxu0 %v924
        %v1114 = vpop.f32.mrb[0].mxu0
        %v1115 = vadd.f32 0.0, %v1114
        %v1116 = vpop.f32.mrb[0].mxu0
        %v1117 = vpop.f32.mrb[0].mxu0
        %v1118 = vadd.f32 0.0, %v1117
        %v1119 = vpop.f32.mrb[0].mxu0
        %1120 = vmatprep.mubr.bf16.mxu0 %v927
        %1121 = vmatmul.mubr.bf16.gmra.mrb[0].mxu0 %v926
        %v1122 = vpop.f32.mrb[0].mxu0
        %v1123 = vadd.f32 0.0, %v1122
        %v1124 = vpop.f32.mrb[0].mxu0
        %v1125 = vpop.f32.mrb[0].mxu0
        %v1126 = vadd.f32 0.0, %v1125
        %v1127 = vpop.f32.mrb[0].mxu0
        %1128 = vmatprep.mubr.bf16.mxu0 %v929
        %1129 = vmatmul.mubr.bf16.gmra.mrb[0].mxu0 %v928
        %v1130 = vpop.f32.mrb[0].mxu0
        %v1131 = vadd.f32 0.0, %v1130
        %v1132 = vpop.f32.mrb[0].mxu0
        %v1133 = vpop.f32.mrb[0].mxu0
        %v1134 = vadd.f32 0.0, %v1133
        %v1135 = vpop.f32.mrb[0].mxu0
        %1136 = vmatprep.mubr.bf16.mxu0 %v931
        %1137 = vmatmul.mubr.bf16.gmra.mrb[0].mxu0 %v930
        %v1138 = vpop.f32.mrb[0].mxu0
        %v1139 = vadd.f32 0.0, %v1138
        %v1140 = vpop.f32.mrb[0].mxu0
        %v1141 = vpop.f32.mrb[0].mxu0
        %v1142 = vadd.f32 0.0, %v1141
        %v1143 = vpop.f32.mrb[0].mxu0
        %1144 = vmatprep.mubr.bf16.mxu0 %v933
        %1145 = vmatmul.mubr.bf16.gmra.mrb[0].mxu0 %v932
        %v1146 = vpop.f32.mrb[0].mxu0
        %v1147 = vadd.f32 0.0, %v1146
        %v1148 = vpop.f32.mrb[0].mxu0
        %v1149 = vpop.f32.mrb[0].mxu0
        %v1150 = vadd.f32 0.0, %v1149
        %v1151 = vpop.f32.mrb[0].mxu0
        %1152 = vmatprep.mubr.bf16.mxu0 %v935
        %1153 = vmatmul.mubr.bf16.gmra.mrb[0].mxu0 %v934
        %v1154 = vpop.f32.mrb[0].mxu0
        %v1155 = vadd.f32 0.0, %v1154
        %v1156 = vpop.f32.mrb[0].mxu0
        %v1157 = vpop.f32.mrb[0].mxu0
        %v1158 = vadd.f32 0.0, %v1157
        %v1159 = vpop.f32.mrb[0].mxu0
        %1160 = vdwg.mxu0
        %1161 = vst [vmem:[%s264] sm:$0xff] %v1099
        %1162 = vst [vmem:[%s264 + $0x8] sm:$0xff] %v1102
        %1163 = vst [vmem:[%s264 + $0x10] sm:$0xff] %v1107
        %1164 = vst [vmem:[%s264 + $0x18] sm:$0xff] %v1110
        %1165 = vst [vmem:[%s264 + $0x20] sm:$0xff] %v1115
        %1166 = vst [vmem:[%s264 + $0x28] sm:$0xff] %v1118
        %1167 = vst [vmem:[%s264 + $0x30] sm:$0xff] %v1123
        %1168 = vst [vmem:[%s264 + $0x38] sm:$0xff] %v1126
        %1169 = vst [vmem:[%s264 + $0x40] sm:$0xff] %v1131
        %1170 = vst [vmem:[%s264 + $0x48] sm:$0xff] %v1134
        %1171 = vst [vmem:[%s264 + $0x50] sm:$0xff] %v1139
        %1172 = vst [vmem:[%s264 + $0x58] sm:$0xff] %v1142
        %1173 = vst [vmem:[%s264 + $0x60] sm:$0xff] %v1147
        %1174 = vst [vmem:[%s264 + $0x68] sm:$0xff] %v1150
        %1175 = vst [vmem:[%s264 + $0x70] sm:$0xff] %v1155
        %1176 = vst [vmem:[%s264 + $0x78] sm:$0xff] %v1158
        %s1177 = sand.u32 %s144, 1
        %s1178 = scalar_lea.sflag [#allocation4], %s1177
        %s1179 = sand.u32 %s144, 1
        %s1180 = smul.addr %s1179, 128
        %s1181 = scalar_lea.vmem [#allocation7], %s1180
        // Predicated region
        $region49: #{tpu_custom_call.1} parent=39 // pred_check
          %p1182 = pneg %p154
        $region50: #{tpu_custom_call.1} parent=39 // pred_check_branch
          %1184 = sbr.rel (%p1182) target = $region52
        $region51: #{tpu_custom_call.1} parent=39 // pred_region
          %s1185 = smul.u32 16, %s21
          %s1187 = ssub.s32 2048, 2048
          %1188 = vsyncadd %s1178, %s1187
          %s1189 = smul.addr %s1185, 128
          %s1190 = scalar_lea.hbm %s5, %s1189
          %s1191 = sshll.u32 %s1181, 4
          %s1192 = int_to_ptr.vmem [resolvable:$true] %s1191
          %1197 = dma.vmem_to_hbm [thread:$0]  %s1192, 2048, %s1190, %s1178, 128, 128, 8
        $region52: #{tpu_custom_call.1} parent=39 // pred_fallthru
          _
      $region40: #{tpu_custom_call.1} parent=5 // pred_fallthru
        _
      %p1198 = scmp.le.s32.totalorder 2, %s16
      // Predicated region
      $region53: #{tpu_custom_call.1} parent=5 // pred_check
        %p1199 = pneg %p1198
      $region54: #{tpu_custom_call.1} parent=5 // pred_check_branch
        %1201 = sbr.rel (%p1199) target = $region56
      $region55: #{tpu_custom_call.1} parent=5 // pred_region
        %s1202 = ssub.s32 %s16, 2
        // Predicated region
        $region57: #{tpu_custom_call.1} parent=55 // pred_check
          %p1203 = pneg %p160
        $region58: #{tpu_custom_call.1} parent=55 // pred_check_branch
          %1205 = sbr.rel (%p1203) target = $region60
        $region59: #{tpu_custom_call.1} parent=55 // pred_region
          %s1206 = sand.u32 %s145, 1
          %s1207 = scalar_lea.sflag [#allocation4], %s1206
          %s1208 = sand.u32 %s145, 1
          %s1209 = smul.addr %s1208, 128
          %s1210 = scalar_lea.vmem [#allocation7], %s1209
          %1211 = dma.done %s1207, 2048
        $region60: #{tpu_custom_call.1} parent=55 // pred_fallthru
          _
      $region56: #{tpu_custom_call.1} parent=5 // pred_fallthru
        _
    $region6: #{tpu_custom_call.1} parent=1 // loop_footer
      %s20 = sadd.s32 1, %s16
    $region7: #{tpu_custom_call.1} parent=1 // loop_footer_branch
      %15 = sbr.rel target = $region3
    $region8: #{tpu_custom_call.1} parent=1 // loop_exit
      _
    %1212 = vsyncpa [#allocation3], 1
    %s1213 = scalar_lea.sflag [#allocation3], 1
    %1214 = vsyncpa %s1213, 1
    %1215 = vsyncpa [#allocation6], 1
    %1216 = vsyncpa [#allocation4], 1
    %s1217 = scalar_lea.sflag [#allocation4], 1
    %1218 = vsyncpa %s1217, 1

</llo_original>
